<compile_context>
chip_gen: v7x
topology: tpu7x:2x2x1
jax: 0.10.0
libtpu: 0.0.40
codegen_flags: <defaults>
</compile_context>

<pallas_src>
import functools

import jax
import jax.numpy as jnp
from jax.experimental import pallas as pl
from jax.experimental.pallas import tpu as pltpu


def _moving_sum_kernel(x_ref, o_ref, *, kernel_size, pad, l_in, l_out):
    """Replicate-padded moving mean along axis 0 (sublanes).

    x_ref: (l_in, n)   o_ref: (l_out, n)
    l_out = l_in + 2*pad - kernel_size + 1   (stride handled by the wrapper)
    """
    x = x_ref[...].astype(jnp.float32)   # f32 accumulation (also for bf16 inputs)
    n = x.shape[-1]

    # Replicate padding built as a value: no scratch Ref, no ref-store round trip.
    if pad > 0:
        first = jnp.broadcast_to(x[0:1, :], (pad, n))
        last = jnp.broadcast_to(x[l_in - 1:l_in, :], (pad, n))
        xp = jnp.concatenate([first, x, last], axis=0)
    else:
        xp = x

    # Doubling tree over the window: `c` holds running power-of-two-width window
    # sums; they are combined following the binary expansion of kernel_size.
    # ~2*log2(k) adds instead of k-1, all with static sublane offsets.  All rows
    # read below are exact (out-of-range combinations only affect rows >= l_out).
    c = xp
    width = 1
    off = 0
    acc = None
    kk = kernel_size
    while kk:
        if kk & 1:
            term = c[off:off + l_out, :]
            acc = term if acc is None else acc + term
            off += width
        kk >>= 1
        if kk:
            c = c[:-width, :] + c[width:, :]
            width *= 2

    o_ref[...] = (acc * (1.0 / kernel_size)).astype(o_ref.dtype)


def _round_up(a, m):
    return -(-a // m) * m


def _vmem_plan():
    """Generation-aware (block_budget_bytes, vmem_limit_bytes, n_tensorcores)."""
    vmem_phys = 128 * 1024 * 1024
    try:
        info = pltpu.get_tpu_info()
        vmem_phys = int(getattr(info, "vmem_capacity_bytes", vmem_phys))
    except Exception:
        pass
    if vmem_phys <= 64 * 1024 * 1024:
        # v7x: 64 MiB VMEM per TensorCore, 2 TensorCores share a chip.
        return 16 * 1024 * 1024, 48 * 1024 * 1024, 2
    # v5e / v6e: 128 MiB VMEM, single TensorCore -> one big block is optimal.
    return 40 * 1024 * 1024, 96 * 1024 * 1024, 1


def moving_avg(x, kernel_size: int, stride: int):
    """x: (B, L, C) -> (B, L_out, C), matching the PyTorch module."""
    assert kernel_size >= 1 and stride >= 1
    B, L, C = x.shape
    pad = (kernel_size - 1) // 2
    Lp = L + 2 * pad
    L_s1 = Lp - kernel_size + 1                   # stride-1 output length
    L_out = (Lp - kernel_size) // stride + 1      # module's output length
    assert L_s1 >= 1, "kernel_size too large for this sequence length"

    budget, vmem_limit, n_cores = _vmem_plan()
    isz = jnp.dtype(x.dtype).itemsize
    # Per lane-column VMEM bytes: double-buffered input & output blocks plus
    # ~3 live f32 working slabs of padded length (xp / partial sums / acc).
    bytes_per_lane = 2 * L * isz + 2 * L_s1 * isz + 3 * Lp * 4

    kernel = functools.partial(_moving_sum_kernel, kernel_size=kernel_size,
                               pad=pad, l_in=L, l_out=L_s1)

    if C < 128:
        # --- Lane-dense path: time on sublanes, batch*channel on lanes. -----
        N = B * C
        xt = jnp.transpose(x, (1, 0, 2)).reshape(L, N)   # one fused XLA copy
        if N <= 128:
            nt = N                                        # single block
        else:
            nt = max(128, (budget // bytes_per_lane) // 128 * 128)
            if n_cores > 1:                               # v7x: keep >= 2 blocks
                nt = min(nt, _round_up(-(-N // n_cores), 128))
            nt = min(nt, _round_up(N, 128))
            if nt >= N:
                nt = N
        out2 = pl.pallas_call(
            kernel,
            out_shape=jax.ShapeDtypeStruct((L_s1, N), x.dtype),
            grid=(pl.cdiv(N, nt),),
            in_specs=[pl.BlockSpec((L, nt), lambda n: (0, n))],
            out_specs=pl.BlockSpec((L_s1, nt), lambda n: (0, n)),
            compiler_params=pltpu.CompilerParams(
                dimension_semantics=("parallel",),
                vmem_limit_bytes=vmem_limit),
        )(xt)
        out = jnp.transpose(out2.reshape(L_s1, B, C), (1, 0, 2))
    else:
        # --- C >= 128: already lane-dense; tile channels, squeeze batch. ----
        ct = max(128, (budget // bytes_per_lane) // 128 * 128)
        if n_cores > 1 and B == 1:                        # v7x with a 1-row grid
            ct = min(ct, _round_up(-(-C // n_cores), 128))
        ct = min(ct, _round_up(C, 128))
        if ct >= C:
            ct = C
        out = pl.pallas_call(
            kernel,
            out_shape=jax.ShapeDtypeStruct((B, L_s1, C), x.dtype),
            grid=(B, pl.cdiv(C, ct)),
            in_specs=[pl.BlockSpec((None, L, ct), lambda b, c: (b, 0, c))],
            out_specs=pl.BlockSpec((None, L_s1, ct), lambda b, c: (b, 0, c)),
            compiler_params=pltpu.CompilerParams(
                dimension_semantics=("parallel", "parallel"),
                vmem_limit_bytes=vmem_limit),
        )(x)

    if stride > 1:
        # AvgPool1d stride: subsample the stride-1 result with a cheap XLA
        # strided slice (keeps strided sublane reads out of the kernel).
        out = out[:, 0:(L_out - 1) * stride + 1:stride, :]
    return out


def moving_avg_ref(x, kernel_size: int, stride: int):
    """Pure-JAX reference mirroring the PyTorch module, for verification."""
    B, L, C = x.shape
    pad = (kernel_size - 1) // 2
    front = jnp.broadcast_to(x[:, 0:1, :], (B, pad, C))
    end = jnp.broadcast_to(x[:, L - 1:L, :], (B, pad, C))
    xp = jnp.concatenate([front, x, end], axis=1)
    Lp = L + 2 * pad
    L_out = (Lp - kernel_size) // stride + 1
    outs = [jnp.mean(xp[:, t * stride:t * stride + kernel_size, :], axis=1)
            for t in range(L_out)]
    return jnp.stack(outs, axis=1)


if __name__ == "__main__":
    key = jax.random.PRNGKey(0)
    tests = [
        # (B, L, C, kernel_size, stride)
        (2, 16, 8, 5, 1),     # lane-dense (C < 128) path, odd kernel, stride 1
        (2, 16, 128, 5, 1),   # channel-tiled (C >= 128) path
        (2, 16, 8, 4, 2),     # even kernel + stride > 1 (XLA subsampling)
    ]
    for i, (B, L, C, k, s) in enumerate(tests):
        key, sub = jax.random.split(key)
        x = jax.random.normal(sub, (B, L, C), dtype=jnp.float32)
        out = jax.block_until_ready(moving_avg(x, k, s))
        ref = moving_avg_ref(x, k, s)
        assert out.shape == ref.shape, (i, out.shape, ref.shape)
        assert jnp.allclose(out, ref, atol=1e-5, rtol=1e-5), f"mismatch in test {i}"
    print("KERNEL_OK")
</pallas_src>

<mosaic_0001>
module attributes {stable_mosaic.version = 11 : i64} {
  func.func @_moving_sum_kernel(%arg0: i32, %arg1: memref<16x16xf32, #tpu.memory_space<vmem>>, %arg2: memref<16x16xf32, #tpu.memory_space<vmem>>) attributes {dimension_semantics = [#tpu.dimension_semantics<parallel>], iteration_bounds = array<i64: 1>, scalar_prefetch = 0 : i64, scratch_operands = 0 : i64, tpu.core_type = #tpu.core_type<tc>, window_params = [{transform_indices = @transform_0, window_bounds = array<i64: 16, 16>}, {transform_indices = @transform_1, window_bounds = array<i64: 16, 16>}]} {
    %c0 = arith.constant 0 : index
    %c0_0 = arith.constant 0 : index
    %0 = vector.load %arg1[%c0, %c0_0] : memref<16x16xf32, #tpu.memory_space<vmem>>, vector<16x16xf32>
    %1 = vector.extract_strided_slice %0 {offsets = [0, 0], sizes = [1, 16], strides = [1, 1]} : vector<16x16xf32> to vector<1x16xf32>
    %2 = vector.shape_cast %1 : vector<1x16xf32> to vector<1x16xf32>
    %3 = vector.broadcast %2 : vector<1x16xf32> to vector<2x16xf32>
    %4 = vector.extract_strided_slice %0 {offsets = [15, 0], sizes = [1, 16], strides = [1, 1]} : vector<16x16xf32> to vector<1x16xf32>
    %5 = vector.shape_cast %4 : vector<1x16xf32> to vector<1x16xf32>
    %6 = vector.broadcast %5 : vector<1x16xf32> to vector<2x16xf32>
    %7 = tpu.concatenate %3, %0, %6 in 0 : vector<2x16xf32>, vector<16x16xf32>, vector<2x16xf32> -> vector<20x16xf32>
    %8 = vector.extract_strided_slice %7 {offsets = [0, 0], sizes = [16, 16], strides = [1, 1]} : vector<20x16xf32> to vector<16x16xf32>
    %9 = vector.extract_strided_slice %7 {offsets = [0, 0], sizes = [19, 16], strides = [1, 1]} : vector<20x16xf32> to vector<19x16xf32>
    %10 = vector.extract_strided_slice %7 {offsets = [1, 0], sizes = [19, 16], strides = [1, 1]} : vector<20x16xf32> to vector<19x16xf32>
    %11 = arith.addf %9, %10 : vector<19x16xf32>
    %12 = vector.extract_strided_slice %11 {offsets = [0, 0], sizes = [17, 16], strides = [1, 1]} : vector<19x16xf32> to vector<17x16xf32>
    %13 = vector.extract_strided_slice %11 {offsets = [2, 0], sizes = [17, 16], strides = [1, 1]} : vector<19x16xf32> to vector<17x16xf32>
    %14 = arith.addf %12, %13 : vector<17x16xf32>
    %15 = vector.extract_strided_slice %14 {offsets = [1, 0], sizes = [16, 16], strides = [1, 1]} : vector<17x16xf32> to vector<16x16xf32>
    %16 = arith.addf %8, %15 : vector<16x16xf32>
    %cst = arith.constant 2.000000e-01 : f32
    %17 = vector.broadcast %cst : f32 to vector<16x16xf32>
    %18 = arith.mulf %16, %17 : vector<16x16xf32>
    %c0_1 = arith.constant 0 : index
    %c0_2 = arith.constant 0 : index
    %19 = vector.load %arg2[%c0_1, %c0_2] : memref<16x16xf32, #tpu.memory_space<vmem>>, vector<16x16xf32>
    tpu.vector_store %arg2[%c0_1, %c0_2], %18 {strides = array<i32>} : memref<16x16xf32, #tpu.memory_space<vmem>>, vector<16x16xf32>,
    return
  }
  func.func @transform_0(%arg0: i32) -> (i32, i32) {
    %c0_i32 = arith.constant 0 : i32
    %c0_i32_0 = arith.constant 0 : i32
    return %c0_i32, %arg0 : i32, i32
  }
  func.func @transform_1(%arg0: i32) -> (i32, i32) {
    %c0_i32 = arith.constant 0 : i32
    %c0_i32_0 = arith.constant 0 : i32
    return %c0_i32, %arg0 : i32, i32
  }
}

</mosaic_0001>

<llo_original>
// kernel: tpu_custom_call.1
$region0: #{tpu_custom_call.1}
  #allocation0 [shape = 'u32[]', space=smem, size = 0x4, offset = 0x4, fixed_abs, tag = 'smem constant byte address 0x4 - core index']
  #allocation1 [shape = 'u32[144,128]{1,0:T(1,128)}', space=vmem, size = 0x12000, scoped, tag = 'internal scratch']
  %s0 = inlined_call_operand.hbm [shape: f32[16,16], index: 0, kind: input, shape index: {}]
  %s1 = inlined_call_operand.hbm [shape: f32[16,16], index: 1, kind: output, shape index: {}]
  %s2 = sld [smem:[#allocation0]]
  $region18: #{tpu_custom_call.1} parent=0
    _
  %s4 = ssub.s32 1, %s2
  %s5 = scalar_select 0, %s4, %s2
  $region1: #{tpu_custom_call.1} parent=0
    #allocation2 [shape = 'u8[8192]{0}', space=vmem, size = 0x2000, scoped, tag = 'input window, operand 0, single buffered']
    #allocation3 [shape = 's32[1]{0}', space=sflag, size = 0x4, scoped, tag = 'scoped memory for tpu_custom_call.1']
    #allocation4 [shape = 's32[1]{0}', space=sflag, size = 0x4, scoped, tag = 'scoped memory for tpu_custom_call.1']
    #allocation5 [shape = 'u8[8192]{0}', space=vmem, size = 0x2000, scoped, tag = 'output window, operand 0, single buffered']
    %6 = vsyncpa [#allocation3], 0
    %7 = vsyncpa [#allocation4], 0
    // Predicated region
    $region2: #{tpu_custom_call.1} parent=1 // pred_check
      _
    $region3: #{tpu_custom_call.1} parent=1 // pred_check_branch
      %9 = sbr.rel (0) target = $region5
    $region4: #{tpu_custom_call.1} parent=1 // pred_region
      %s11 = ssub.s32 256, 256
      %12 = vsyncadd [#allocation3], %s11
      %s13 = sshll.u32 [#allocation2], 4
      %s14 = int_to_ptr.vmem [resolvable:$true] %s13
      %19 = dma.hbm_to_vmem [thread:$0]  %s0, 256, %s14, [#allocation3], 128, 128, 8
    $region5: #{tpu_custom_call.1} parent=1 // pred_fallthru
      _
    // Predicated region
    $region6: #{tpu_custom_call.1} parent=1 // pred_check
      _
    $region7: #{tpu_custom_call.1} parent=1 // pred_check_branch
      %21 = sbr.rel (0) target = $region9
    $region8: #{tpu_custom_call.1} parent=1 // pred_region
      %22 = dma.done [#allocation3], 256
    $region9: #{tpu_custom_call.1} parent=1 // pred_fallthru
      _
    %v23 = vld [vmem:[#allocation2] sm:$0xff]
    %v24 = vld [vmem:[#allocation2 + $0x8] sm:$0xff]
    %v25 = vlaneseq
    %v26 = vshrl.u32 %v25, 7
    %v27 = vsub.s32 0, %v26
    %v28 = vrot.slane %v23, %v27
    %v29 = vlaneseq
    %v30 = vshrl.u32 %v29, 7
    %v31 = vsub.s32 7, %v30
    %v32 = vrot.slane %v24, %v31
    %vm35 = vcmask 1041408
    %v36 = vrot.slane %v23, 6
    %v37 = vrot.slane %v24, 6
    %v38 = vsel %vm35, %v36, %v37
    %v42 = vsel %vm35, %v28, %v36
    %v43 = vsel %vm35, %v37, %v32
    %vm46 = vcmask 1046528
    %v47 = vrot.slane %v42, 1
    %v48 = vrot.slane %v38, 1
    %v49 = vsel %vm46, %v47, %v48
    %v50 = vrot.slane %v43, 1
    %v51 = vsel %vm46, %v48, %v50
    %v55 = vadd.f32 %v42, %v49
    %v56 = vadd.f32 %v38, %v51
    %v57 = vadd.f32 %v43, %v50
    %vm61 = vcmask 1045504
    %v62 = vrot.slane %v55, 2
    %v63 = vrot.slane %v56, 2
    %v64 = vsel %vm61, %v62, %v63
    %v65 = vrot.slane %v57, 2
    %v66 = vsel %vm61, %v63, %v65
    %v70 = vadd.f32 %v55, %v64
    %v71 = vadd.f32 %v56, %v66
    %v72 = vadd.f32 %v57, %v65
    %v76 = vrot.slane %v70, 1
    %v77 = vrot.slane %v71, 1
    %v78 = vsel %vm46, %v76, %v77
    %v79 = vrot.slane %v72, 1
    %v80 = vsel %vm46, %v77, %v79
    %v83 = vadd.f32 %v42, %v78
    %v84 = vadd.f32 %v38, %v80
    %v85 = vmul.f32 %v83, 0.2
    %v86 = vmul.f32 %v84, 0.2
    %vm87 = vcmask 130048
    %88 = vst.msk [vmem:[#allocation5] sm:$0xff] %vm87, %v85
    %89 = vst.msk [vmem:[#allocation5 + $0x8] sm:$0xff] %vm87, %v86
    // Predicated region
    $region10: #{tpu_custom_call.1} parent=1 // pred_check
      _
    $region11: #{tpu_custom_call.1} parent=1 // pred_check_branch
      %91 = sbr.rel (0) target = $region13
    $region12: #{tpu_custom_call.1} parent=1 // pred_region
      %s93 = ssub.s32 256, 256
      %94 = vsyncadd [#allocation4], %s93
      %s95 = sshll.u32 [#allocation5], 4
      %s96 = int_to_ptr.vmem [resolvable:$true] %s95
      %101 = dma.vmem_to_hbm [thread:$0]  %s96, 256, %s1, [#allocation4], 128, 128, 8
    $region13: #{tpu_custom_call.1} parent=1 // pred_fallthru
      _
    // Predicated region
    $region14: #{tpu_custom_call.1} parent=1 // pred_check
      _
    $region15: #{tpu_custom_call.1} parent=1 // pred_check_branch
      %103 = sbr.rel (0) target = $region17
    $region16: #{tpu_custom_call.1} parent=1 // pred_region
      %104 = dma.done [#allocation4], 256
    $region17: #{tpu_custom_call.1} parent=1 // pred_fallthru
      _
    %105 = vsyncpa [#allocation3], 1
    %106 = vsyncpa [#allocation4], 1

</llo_original>
